<compile_context>
chip_gen: v7x
topology: tpu7x:2x2x1
jax: 0.10.0
libtpu: 0.0.40
codegen_flags: <defaults>
</compile_context>

<pallas_src>
import math

import jax
import jax.numpy as jnp
import numpy as np
from jax.experimental import pallas as pl
from jax.experimental.pallas import tpu as pltpu


# ---------------------------------------------------------------------------
# Kernels
# ---------------------------------------------------------------------------

def _sd1d_bcast_kernel(x_ref, m_ref, o_ref):
    """g == 1 path. x:(rb, wb), m:(rb, 1) f32 broadcast across lanes."""
    x = x_ref[...].astype(jnp.float32)
    o_ref[...] = (x * m_ref[...]).astype(o_ref.dtype)


def _sd1d_fold_kernel(x_ref, m_ref, e_ref, o_ref):
    """g > 1 path. x:(rb, W) with W = g*L lanes holding g whole channels.

    m:(rb, g) f32 per-channel scale; e:(g, W) 0/1 matrix with e[k, j] =
    (j // L == k).  The tiny MXU matmul expands per-channel -> per-lane
    without any cross-lane shuffles.
    """
    mexp = jnp.dot(m_ref[...], e_ref[...], preferred_element_type=jnp.float32)
    x = x_ref[...].astype(jnp.float32)
    o_ref[...] = (x * mexp).astype(o_ref.dtype)


# ---------------------------------------------------------------------------
# Tiling helpers
# ---------------------------------------------------------------------------

def _round_up(x, m):
    return ((x + m - 1) // m) * m


def _choose_fold(rows, L):
    """Channels per lane-row (g) so the last dim is a lane-dense multiple of 128."""
    if L % 128 == 0:
        return 1
    g = 128 // math.gcd(L, 128)           # minimal g with (g*L) % 128 == 0
    if rows % g != 0 or g * L > 4096:
        return 1                          # fallback: masked stores (see TODO)
    # Widen a bit for larger unmasked stores while rows still divide evenly.
    while rows % (2 * g) == 0 and 2 * g <= 128 and 2 * g * L <= 4096:
        g *= 2
    return g


def _choose_blocks(R, W, itemsize, lane_tileable):
    """Pick (rb, wb) targeting ~4 MiB x tiles; lane-padding-aware estimate."""
    target = 4 * 1024 * 1024

    def padded(w):
        return _round_up(w, 128)

    # Lane-axis tiling only when one 8-row block would already be too big.
    if lane_tileable and W > 256 and 8 * padded(W) * itemsize > target:
        wb = max(128, min(W, ((target // (8 * itemsize)) // 128) * 128))
    else:
        wb = W

    row_bytes = padded(wb) * itemsize
    if R <= 8:
        rb = R                            # block == full dim (small row count)
    else:
        rb = max(8, min(R, ((target // row_bytes) // 8) * 8))
        # Keep at least 2 row blocks so the "parallel" axis can split across
        # v7x's two TensorCores (no-op on single-TC v5e/v6e).
        half = _round_up(-(-R // 2), 8)
        rb = min(rb, max(8, half))
    return rb, wb


# ---------------------------------------------------------------------------
# Wrapper
# ---------------------------------------------------------------------------

def spatial_dropout_1d(x, p, key, training=True):
    """Pallas SpatialDropout1D. x: (N, C, L). Returns same shape/dtype."""
    if (not training) or p == 0.0:
        return x
    if p >= 1.0:
        return jnp.zeros_like(x)

    N, C, L = x.shape
    keep_prob = 1.0 - float(p)
    rows = N * C
    itemsize = jnp.dtype(x.dtype).itemsize

    # One Bernoulli draw per (n, c); survivors scaled by 1/keep_prob in f32.
    keep = jax.random.bernoulli(key, keep_prob, (rows,))
    mask = jnp.where(keep, jnp.float32(1.0 / keep_prob), jnp.float32(0.0))

    g = _choose_fold(rows, L)
    R, W = rows // g, g * L
    x2 = x.reshape(R, W)                  # contiguous view, no data movement
    rb, wb = _choose_blocks(R, W, itemsize, lane_tileable=(g == 1))
    grid = (pl.cdiv(R, rb), pl.cdiv(W, wb))

    cost = pl.CostEstimate(
        flops=2 * rows * L,
        transcendentals=0,
        bytes_accessed=2 * rows * L * itemsize + rows * 4,
    )
    x_block_bytes = rb * _round_up(wb, 128) * itemsize
    compiler_params = pltpu.CompilerParams(
        dimension_semantics=("parallel", "parallel"),
        vmem_limit_bytes=int(
            min(48 * 1024 * 1024, max(32 * 1024 * 1024, 6 * x_block_bytes))
        ),
    )

    if g == 1:
        m2 = mask.reshape(R, 1)
        out2 = pl.pallas_call(
            _sd1d_bcast_kernel,
            out_shape=jax.ShapeDtypeStruct((R, W), x.dtype),
            grid_spec=pltpu.PrefetchScalarGridSpec(
                num_scalar_prefetch=0,
                grid=grid,
                in_specs=[
                    pl.BlockSpec((rb, wb), lambda i, j: (i, j)),
                    pl.BlockSpec((rb, 1), lambda i, j: (i, 0)),
                ],
                out_specs=pl.BlockSpec((rb, wb), lambda i, j: (i, j)),
            ),
            compiler_params=compiler_params,
            cost_estimate=cost,
        )(x2, m2)
    else:
        m2 = mask.reshape(R, g)
        lane_grp = jnp.arange(W, dtype=jnp.int32) // L
        e = (lane_grp[None, :] == jnp.arange(g, dtype=jnp.int32)[:, None]
             ).astype(jnp.float32)        # (g, W); copied into VMEM once
        out2 = pl.pallas_call(
            _sd1d_fold_kernel,
            out_shape=jax.ShapeDtypeStruct((R, W), x.dtype),
            grid_spec=pltpu.PrefetchScalarGridSpec(
                num_scalar_prefetch=0,
                grid=grid,
                in_specs=[
                    pl.BlockSpec((rb, wb), lambda i, j: (i, j)),
                    pl.BlockSpec((rb, g), lambda i, j: (i, 0)),
                    pl.BlockSpec((g, W), lambda i, j: (0, 0)),
                ],
                out_specs=pl.BlockSpec((rb, wb), lambda i, j: (i, j)),
            ),
            compiler_params=compiler_params,
            cost_estimate=cost,
        )(x2, m2, e)

    return out2.reshape(N, C, L)


# ---------------------------------------------------------------------------
# Demo / correctness check
# ---------------------------------------------------------------------------

if __name__ == "__main__":
    # Module has no weights (only a dropout prob); p is the only parameter.
    p = 0.5
    keep_prob = 1.0 - p
    root = jax.random.PRNGKey(0)
    data_key, drop_key = jax.random.split(root)

    # Fold path (L % 128 != 0 -> channels packed into a lane-dense last dim).
    N, C, L = 2, 4, 16
    x = jax.random.normal(data_key, (N, C, L), dtype=jnp.float32)
    y = jax.block_until_ready(spatial_dropout_1d(x, p=p, key=drop_key, training=True))

    xn, yn = np.asarray(x), np.asarray(y)
    for n in range(N):
        for c in range(C):
            zeroed = np.allclose(yn[n, c], 0.0)
            scaled = np.allclose(yn[n, c], xn[n, c] / keep_prob, rtol=1e-5, atol=1e-5)
            assert zeroed or scaled, f"channel ({n},{c}) not dropped-or-scaled"

    # Broadcast path (L % 128 == 0 -> per-row (rb, 1) mask broadcast).
    x_b = jax.random.normal(data_key, (2, 4, 128), dtype=jnp.float32)
    y_b = jax.block_until_ready(spatial_dropout_1d(x_b, p=p, key=drop_key, training=True))
    xbn, ybn = np.asarray(x_b), np.asarray(y_b)
    for n in range(2):
        for c in range(4):
            assert (np.allclose(ybn[n, c], 0.0)
                    or np.allclose(ybn[n, c], xbn[n, c] / keep_prob,
                                   rtol=1e-5, atol=1e-5)), \
                f"channel ({n},{c}) not dropped-or-scaled (bcast path)"

    # Eval mode is the identity.
    y_eval = spatial_dropout_1d(x, p=p, key=drop_key, training=False)
    assert np.allclose(np.asarray(y_eval), xn)

    print("KERNEL_OK")
</pallas_src>

<mosaic_0001>
module attributes {stable_mosaic.version = 11 : i64} {
  func.func @_sd1d_fold_kernel(%arg0: i32, %arg1: i32, %arg2: memref<1x128xf32, #tpu.memory_space<vmem>>, %arg3: memref<1x8xf32, #tpu.memory_space<vmem>>, %arg4: memref<8x128xf32, #tpu.memory_space<vmem>>, %arg5: memref<1x128xf32, #tpu.memory_space<vmem>>) attributes {dimension_semantics = [#tpu.dimension_semantics<parallel>, #tpu.dimension_semantics<parallel>], iteration_bounds = array<i64: 1, 1>, scalar_prefetch = 0 : i64, scratch_operands = 0 : i64, tpu.core_type = #tpu.core_type<tc>, window_params = [{transform_indices = @transform_0, window_bounds = array<i64: 1, 128>}, {transform_indices = @transform_1, window_bounds = array<i64: 1, 8>}, {pipeline_mode = #tpu.pipeline_mode<synchronous>, transform_indices = @transform_2, window_bounds = array<i64: 8, 128>}, {transform_indices = @transform_3, window_bounds = array<i64: 1, 128>}]} {
    %c0 = arith.constant 0 : index
    %c0_0 = arith.constant 0 : index
    %0 = vector.load %arg3[%c0, %c0_0] : memref<1x8xf32, #tpu.memory_space<vmem>>, vector<1x8xf32>
    %c0_1 = arith.constant 0 : index
    %c0_2 = arith.constant 0 : index
    %1 = vector.load %arg4[%c0_1, %c0_2] : memref<8x128xf32, #tpu.memory_space<vmem>>, vector<8x128xf32>
    %cst = arith.constant dense<0.000000e+00> : vector<1x128xf32>
    %2 = tpu.matmul %0, %1, %cst {dimension_numbers = #tpu.dot_dimension_numbers<[1], [0], [0], [1], [0, 0, 1, 1], [], []>} : vector<1x8xf32>, vector<8x128xf32>, vector<1x128xf32> -> vector<1x128xf32>
    %c0_3 = arith.constant 0 : index
    %c0_4 = arith.constant 0 : index
    %3 = vector.load %arg2[%c0_3, %c0_4] : memref<1x128xf32, #tpu.memory_space<vmem>>, vector<1x128xf32>
    %4 = arith.mulf %3, %2 : vector<1x128xf32>
    %c0_5 = arith.constant 0 : index
    %c0_6 = arith.constant 0 : index
    %5 = vector.load %arg5[%c0_5, %c0_6] : memref<1x128xf32, #tpu.memory_space<vmem>>, vector<1x128xf32>
    tpu.vector_store %arg5[%c0_5, %c0_6], %4 {strides = array<i32>} : memref<1x128xf32, #tpu.memory_space<vmem>>, vector<1x128xf32>,
    return
  }
  func.func @transform_0(%arg0: i32, %arg1: i32) -> (i32, i32) {
    %c0_i32 = arith.constant 0 : i32
    return %arg0, %arg1 : i32, i32
  }
  func.func @transform_1(%arg0: i32, %arg1: i32) -> (i32, i32) {
    %c0_i32 = arith.constant 0 : i32
    %c0_i32_0 = arith.constant 0 : i32
    return %arg0, %c0_i32 : i32, i32
  }
  func.func @transform_2(%arg0: i32, %arg1: i32) -> (i32, i32) {
    %c0_i32 = arith.constant 0 : i32
    %c0_i32_0 = arith.constant 0 : i32
    %c0_i32_1 = arith.constant 0 : i32
    return %c0_i32, %c0_i32_0 : i32, i32
  }
  func.func @transform_3(%arg0: i32, %arg1: i32) -> (i32, i32) {
    %c0_i32 = arith.constant 0 : i32
    return %arg0, %arg1 : i32, i32
  }
}

</mosaic_0001>

<llo_original>
// kernel: tpu_custom_call.1
$region0: #{tpu_custom_call.1}
  #allocation0 [shape = 'u32[]', space=smem, size = 0x4, offset = 0x4, fixed_abs, tag = 'smem constant byte address 0x4 - core index']
  #allocation1 [shape = 'u32[144,128]{1,0:T(1,128)}', space=vmem, size = 0x12000, scoped, tag = 'internal scratch']
  %s0 = inlined_call_operand.hbm [shape: f32[1,128], index: 0, kind: input, shape index: {}]
  %s1 = inlined_call_operand.vmem [shape: f32[1,8], index: 1, kind: input, shape index: {}]
  %s2 = inlined_call_operand.hbm [shape: f32[8,128], index: 2, kind: input, shape index: {}]
  %s3 = inlined_call_operand.hbm [shape: f32[1,128], index: 3, kind: output, shape index: {}]
  %s4 = sld [smem:[#allocation0]]
  $region30: #{tpu_custom_call.1} parent=0
    _
  %s6 = ssub.s32 1, %s4
  %s7 = scalar_select 0, %s6, %s4
  $region1: #{tpu_custom_call.1} parent=0
    #allocation2 [shape = 'u8[512]{0}', space=vmem, size = 0x400, scoped, tag = 'input window, operand 0, single buffered']
    #allocation3 [shape = 's32[1]{0}', space=sflag, size = 0x4, scoped, tag = 'scoped memory for tpu_custom_call.1']
    #allocation4 [shape = 's32[1]{0}', space=sflag, size = 0x4, scoped, tag = 'scoped memory for tpu_custom_call.1']
    #allocation5 [shape = 'u8[4096]{0}', space=vmem, size = 0x1000, scoped, tag = 'input window, operand 2, single buffered']
    #allocation6 [shape = 's32[1]{0}', space=sflag, size = 0x4, scoped, tag = 'scoped memory for tpu_custom_call.1']
    #allocation7 [shape = 'u8[512]{0}', space=vmem, size = 0x400, scoped, tag = 'output window, operand 0, single buffered']
    %8 = vsyncpa [#allocation3], 0
    %9 = vsyncpa [#allocation6], 0
    %10 = vsyncpa [#allocation4], 0
    // Predicated region
    $region2: #{tpu_custom_call.1} parent=1 // pred_check
      _
    $region3: #{tpu_custom_call.1} parent=1 // pred_check_branch
      %12 = sbr.rel (0) target = $region5
    $region4: #{tpu_custom_call.1} parent=1 // pred_region
      %s14 = ssub.s32 16, 16
      %15 = vsyncadd [#allocation3], %s14
      %s17 = sshll.u32 [#allocation2], 4
      %s18 = int_to_ptr.vmem [resolvable:$true] %s17
      %20 = dma.hbm_to_vmem [thread:$0]  %s0, 16, %s18, [#allocation3]
    $region5: #{tpu_custom_call.1} parent=1 // pred_fallthru
      _
    // Predicated region
    $region6: #{tpu_custom_call.1} parent=1 // pred_check
      _
    $region7: #{tpu_custom_call.1} parent=1 // pred_check_branch
      %22 = sbr.rel (0) target = $region9
    $region8: #{tpu_custom_call.1} parent=1 // pred_region
      _
    $region9: #{tpu_custom_call.1} parent=1 // pred_fallthru
      _
    // Predicated region
    $region10: #{tpu_custom_call.1} parent=1 // pred_check
      _
    $region11: #{tpu_custom_call.1} parent=1 // pred_check_branch
      %24 = sbr.rel (0) target = $region13
    $region12: #{tpu_custom_call.1} parent=1 // pred_region
      %s26 = ssub.s32 128, 128
      %27 = vsyncadd [#allocation6], %s26
      %s29 = sshll.u32 [#allocation5], 4
      %s30 = int_to_ptr.vmem [resolvable:$true] %s29
      %32 = dma.hbm_to_vmem [thread:$0]  %s2, 128, %s30, [#allocation6]
    $region13: #{tpu_custom_call.1} parent=1 // pred_fallthru
      _
    // Predicated region
    $region14: #{tpu_custom_call.1} parent=1 // pred_check
      _
    $region15: #{tpu_custom_call.1} parent=1 // pred_check_branch
      %34 = sbr.rel (0) target = $region17
    $region16: #{tpu_custom_call.1} parent=1 // pred_region
      %35 = dma.done [#allocation3], 16
    $region17: #{tpu_custom_call.1} parent=1 // pred_fallthru
      _
    // Predicated region
    $region18: #{tpu_custom_call.1} parent=1 // pred_check
      _
    $region19: #{tpu_custom_call.1} parent=1 // pred_check_branch
      %37 = sbr.rel (0) target = $region21
    $region20: #{tpu_custom_call.1} parent=1 // pred_region
      %38 = dma.done [#allocation6], 128
    $region21: #{tpu_custom_call.1} parent=1 // pred_fallthru
      _
    %v39 = vld [vmem:[%s1] sm:$0x1]
    %v40 = vld [vmem:[#allocation5] sm:$0xff]
    %vm41 = vcmask 64512
    %v43 = vsel %vm41, %v39, 0
    %45 = vmatprep.subr.mxu0 0.0
    %46 = vmatpush1.msra.mxu0 %v40
    %47 = vmatprep.subr.mxu0 0.0
    %48 = vmatpush1.msra.mxu0 0.0
    %49 = vmatprep.subr.mxu0 0.0
    %50 = vmatpush1.msra.mxu0 0.0
    %51 = vmatprep.subr.mxu0 0.0
    %52 = vmatpush1.msra.mxu0 0.0
    %53 = vmatprep.subr.mxu0 0.0
    %54 = vmatpush1.msra.mxu0 0.0
    %55 = vmatprep.subr.mxu0 0.0
    %56 = vmatpush1.msra.mxu0 0.0
    %57 = vmatprep.subr.mxu0 0.0
    %58 = vmatpush1.msra.mxu0 0.0
    %59 = vmatprep.subr.mxu0 0.0
    %60 = vmatpush1.msra.mxu0 0.0
    %61 = vmatprep.subr.mxu0 0.0
    %62 = vmatpush1.msra.mxu0 0.0
    %63 = vmatprep.subr.mxu0 0.0
    %64 = vmatpush1.msra.mxu0 0.0
    %65 = vmatprep.subr.mxu0 0.0
    %66 = vmatpush1.msra.mxu0 0.0
    %67 = vmatprep.subr.mxu0 0.0
    %68 = vmatpush1.msra.mxu0 0.0
    %69 = vmatprep.subr.mxu0 0.0
    %70 = vmatpush1.msra.mxu0 0.0
    %71 = vmatprep.subr.mxu0 0.0
    %72 = vmatpush1.msra.mxu0 0.0
    %73 = vmatprep.subr.mxu0 0.0
    %74 = vmatpush1.msra.mxu0 0.0
    %75 = vmatprep.subr.mxu0 0.0
    %76 = vmatpush1.msra.mxu0 0.0
    %77 = vmatprep.subr.mxu0 0.0
    %78 = vmatpush1.msra.mxu0 0.0
    %79 = vmatprep.subr.mxu0 0.0
    %80 = vmatpush1.msra.mxu0 0.0
    %81 = vmatprep.subr.mxu0 0.0
    %82 = vmatpush1.msra.mxu0 0.0
    %83 = vmatprep.subr.mxu0 0.0
    %84 = vmatpush1.msra.mxu0 0.0
    %85 = vmatprep.subr.mxu0 0.0
    %86 = vmatpush1.msra.mxu0 0.0
    %87 = vmatprep.subr.mxu0 0.0
    %88 = vmatpush1.msra.mxu0 0.0
    %89 = vmatprep.subr.mxu0 0.0
    %90 = vmatpush1.msra.mxu0 0.0
    %91 = vmatprep.subr.mxu0 0.0
    %92 = vmatpush1.msra.mxu0 0.0
    %93 = vmatprep.subr.mxu0 0.0
    %94 = vmatpush1.msra.mxu0 0.0
    %95 = vmatprep.subr.mxu0 0.0
    %96 = vmatpush1.msra.mxu0 0.0
    %97 = vmatprep.subr.mxu0 0.0
    %98 = vmatpush1.msra.mxu0 0.0
    %99 = vmatprep.subr.mxu0 0.0
    %100 = vmatpush1.msra.mxu0 0.0
    %101 = vmatprep.subr.mxu0 0.0
    %102 = vmatpush1.msra.mxu0 0.0
    %103 = vmatprep.subr.mxu0 0.0
    %104 = vmatpush1.msra.mxu0 0.0
    %105 = vmatprep.subr.mxu0 0.0
    %106 = vmatpush1.msra.mxu0 0.0
    %107 = vmatprep.subr.mxu0 0.0
    %108 = vmatpush1.msra.mxu0 0.0
    %109 = vmatprep.mubr.f32.mxu0 0.0
    %110 = vmatmul.mubr.f32.gmra.mrb[0].mxu0 %v43
    %v111 = vpop.f32.mrb[0].mxu0
    %v112 = vadd.f32 0.0, %v111
    %v113 = vpop.f32.mrb[0].mxu0
    %114 = vdwg.mxu0
    %v115 = vld [vmem:[#allocation2] sm:$0x1]
    %v116 = vmul.f32 %v115, %v112
    %117 = vst [vmem:[#allocation7] sm:$0x1] %v116
    // Predicated region
    $region22: #{tpu_custom_call.1} parent=1 // pred_check
      _
    $region23: #{tpu_custom_call.1} parent=1 // pred_check_branch
      %119 = sbr.rel (0) target = $region25
    $region24: #{tpu_custom_call.1} parent=1 // pred_region
      %s121 = ssub.s32 16, 16
      %122 = vsyncadd [#allocation4], %s121
      %s124 = sshll.u32 [#allocation7], 4
      %s125 = int_to_ptr.vmem [resolvable:$true] %s124
      %127 = dma.vmem_to_hbm [thread:$0]  %s125, 16, %s3, [#allocation4]
    $region25: #{tpu_custom_call.1} parent=1 // pred_fallthru
      _
    // Predicated region
    $region26: #{tpu_custom_call.1} parent=1 // pred_check
      _
    $region27: #{tpu_custom_call.1} parent=1 // pred_check_branch
      %129 = sbr.rel (0) target = $region29
    $region28: #{tpu_custom_call.1} parent=1 // pred_region
      %130 = dma.done [#allocation4], 16
    $region29: #{tpu_custom_call.1} parent=1 // pred_fallthru
      _
    %131 = vsyncpa [#allocation3], 1
    %132 = vsyncpa [#allocation6], 1
    %133 = vsyncpa [#allocation4], 1

</llo_original>
